<compile_context>
chip_gen: v5e
topology: v5e:2x2
jax: 0.10.0
libtpu: 0.0.40
codegen_flags: <defaults>
</compile_context>

<pallas_src>
import jax
import jax.numpy as jnp
from jax.experimental import pallas as pl
from jax.experimental.pallas import tpu as pltpu

# ---- hyperparameters (small, consistent with NeuralNet.__init__) ----
VOCAB = 256                     # vocal_size
EMB = int(VOCAB ** 0.25)        # embedding_dim = 4
NFEAT = 8                       # num_features
NOUT = 8                        # num_outputs
H1 = 64                         # h1
H2 = 32                         # h2
BATCH = 8
EPS = 1e-5                      # BatchNorm1d default eps
F32 = jnp.float32


def neuralnet_kernel(x_ref,              # (BATCH, NFEAT*EMB) flattened embeddings
                     w1_ref,             # (NFEAT*EMB, H1)
                     s1_ref, sh1_ref,    # (1, H1) folded BN1 scale / shift (incl. b1)
                     w2_ref,             # (H1, H2)
                     s2_ref, sh2_ref,    # (1, H2) folded BN2 scale / shift (incl. b2)
                     w3_ref, b3_ref,     # (H2, NOUT), (1, NOUT)
                     out_ref):           # (BATCH, NOUT)
    # Linear1 (single batch-fused MXU matmul) + folded BN1 + ReLU
    pre1 = jnp.dot(x_ref[...], w1_ref[...], preferred_element_type=F32)
    x1 = jnp.maximum(pre1 * s1_ref[...] + sh1_ref[...], 0.0)

    # Linear2 + folded BN2 + ReLU
    pre2 = jnp.dot(x1, w2_ref[...], preferred_element_type=F32)
    x2 = jnp.maximum(pre2 * s2_ref[...] + sh2_ref[...], 0.0)

    # Linear3 + Sigmoid, lane-dense (BATCH, NOUT) output
    logits = jnp.dot(x2, w3_ref[...], preferred_element_type=F32) + b3_ref[...]
    out_ref[...] = jax.nn.sigmoid(logits)


def neuralnet_forward(ids, p):
    # ---- wrapper-side preprocessing (all tiny, exact in f32) ----
    # Embedding lookup + Flatten: (B, F) int -> (B, F*E) f32 activation.
    ids_safe = jnp.clip(ids, 0, VOCAB - 1)                 # guard untrusted ids
    x = p['emb'][ids_safe].reshape(ids.shape[0], NFEAT * EMB).astype(F32)

    # Fold BN (eval-mode running stats) + linear bias into scale/shift.
    inv1 = 1.0 / jnp.sqrt(p['bn1_var'] + EPS)
    s1 = (p['bn1_gamma'] * inv1).reshape(1, H1)
    sh1 = ((p['b1'] - p['bn1_mean']) * s1[0] + p['bn1_beta']).reshape(1, H1)

    inv2 = 1.0 / jnp.sqrt(p['bn2_var'] + EPS)
    s2 = (p['bn2_gamma'] * inv2).reshape(1, H2)
    sh2 = ((p['b2'] - p['bn2_mean']) * s2[0] + p['bn2_beta']).reshape(1, H2)

    b3 = p['b3'].reshape(1, NOUT)

    args = (x, p['w1'], s1, sh1, p['w2'], s2, sh2, p['w3'], b3)
    vmem = pl.BlockSpec(memory_space=pltpu.MemorySpace.VMEM)
    return pl.pallas_call(
        neuralnet_kernel,
        out_shape=jax.ShapeDtypeStruct((ids.shape[0], NOUT), F32),
        in_specs=[vmem] * len(args),
        out_specs=vmem,
    )(*args)


def make_params(key):
    ks = jax.random.split(key, 16)

    def nrm(k, shape, s=0.1):
        return jax.random.normal(k, shape, F32) * s

    p = {}
    p['emb'] = nrm(ks[0], (VOCAB, EMB), 0.5)
    p['w1'] = nrm(ks[1], (NFEAT * EMB, H1))
    p['b1'] = nrm(ks[2], (H1,))
    p['bn1_gamma'] = 1.0 + nrm(ks[3], (H1,))
    p['bn1_beta'] = nrm(ks[4], (H1,))
    p['bn1_mean'] = nrm(ks[5], (H1,))
    p['bn1_var'] = jnp.abs(nrm(ks[6], (H1,))) + 0.5
    p['w2'] = nrm(ks[7], (H1, H2))
    p['b2'] = nrm(ks[8], (H2,))
    p['bn2_gamma'] = 1.0 + nrm(ks[9], (H2,))
    p['bn2_beta'] = nrm(ks[10], (H2,))
    p['bn2_mean'] = nrm(ks[11], (H2,))
    p['bn2_var'] = jnp.abs(nrm(ks[12], (H2,))) + 0.5
    p['w3'] = nrm(ks[13], (H2, NOUT))
    p['b3'] = nrm(ks[14], (NOUT,))
    return p


def reference_forward(ids, p):
    """Pure-JAX mirror of the PyTorch forward (eval mode), for correctness."""
    with jax.default_matmul_precision('float32'):
        emb = p['emb'][ids]                                  # (B, F, E)
        x = emb.reshape(ids.shape[0], NFEAT * EMB)           # Flatten
        y1 = x @ p['w1'] + p['b1']
        y1 = ((y1 - p['bn1_mean']) / jnp.sqrt(p['bn1_var'] + EPS)
              * p['bn1_gamma'] + p['bn1_beta'])
        x1 = jax.nn.relu(y1)
        y2 = x1 @ p['w2'] + p['b2']
        y2 = ((y2 - p['bn2_mean']) / jnp.sqrt(p['bn2_var'] + EPS)
              * p['bn2_gamma'] + p['bn2_beta'])
        x2 = jax.nn.relu(y2)
        y3 = x2 @ p['w3'] + p['b3']
        return jax.nn.sigmoid(y3)


if __name__ == "__main__":
    key = jax.random.PRNGKey(0)
    k_ids, k_params = jax.random.split(key)
    params = make_params(k_params)
    ids = jax.random.randint(k_ids, (BATCH, NFEAT), 0, VOCAB, dtype=jnp.int32)

    out = jax.block_until_ready(neuralnet_forward(ids, params))
    ref = reference_forward(ids, params)

    assert out.shape == (BATCH, NOUT)
    assert jnp.allclose(out, ref, atol=1e-3, rtol=1e-3)
    print("KERNEL_OK")
</pallas_src>

<mosaic_0001>
module attributes {stable_mosaic.version = 11 : i64} {
  func.func @neuralnet_kernel(%arg0: memref<8x32xf32, #tpu.memory_space<vmem>>, %arg1: memref<32x64xf32, #tpu.memory_space<vmem>>, %arg2: memref<1x64xf32, #tpu.memory_space<vmem>>, %arg3: memref<1x64xf32, #tpu.memory_space<vmem>>, %arg4: memref<64x32xf32, #tpu.memory_space<vmem>>, %arg5: memref<1x32xf32, #tpu.memory_space<vmem>>, %arg6: memref<1x32xf32, #tpu.memory_space<vmem>>, %arg7: memref<32x8xf32, #tpu.memory_space<vmem>>, %arg8: memref<1x8xf32, #tpu.memory_space<vmem>>, %arg9: memref<8x8xf32, #tpu.memory_space<vmem>>) attributes {dimension_semantics = [], scalar_prefetch = 0 : i64, scratch_operands = 0 : i64, tpu.core_type = #tpu.core_type<tc>} {
    %c0 = arith.constant 0 : index
    %c0_0 = arith.constant 0 : index
    %0 = vector.load %arg0[%c0, %c0_0] : memref<8x32xf32, #tpu.memory_space<vmem>>, vector<8x32xf32>
    %c0_1 = arith.constant 0 : index
    %c0_2 = arith.constant 0 : index
    %1 = vector.load %arg1[%c0_1, %c0_2] : memref<32x64xf32, #tpu.memory_space<vmem>>, vector<32x64xf32>
    %cst = arith.constant dense<0.000000e+00> : vector<8x64xf32>
    %2 = tpu.matmul %0, %1, %cst {dimension_numbers = #tpu.dot_dimension_numbers<[1], [0], [0], [1], [0, 0, 1, 1], [], []>} : vector<8x32xf32>, vector<32x64xf32>, vector<8x64xf32> -> vector<8x64xf32>
    %c0_3 = arith.constant 0 : index
    %c0_4 = arith.constant 0 : index
    %3 = vector.load %arg2[%c0_3, %c0_4] : memref<1x64xf32, #tpu.memory_space<vmem>>, vector<1x64xf32>
    %4 = vector.broadcast %3 : vector<1x64xf32> to vector<8x64xf32>
    %5 = arith.mulf %2, %4 : vector<8x64xf32>
    %c0_5 = arith.constant 0 : index
    %c0_6 = arith.constant 0 : index
    %6 = vector.load %arg3[%c0_5, %c0_6] : memref<1x64xf32, #tpu.memory_space<vmem>>, vector<1x64xf32>
    %7 = vector.broadcast %6 : vector<1x64xf32> to vector<8x64xf32>
    %8 = arith.addf %5, %7 : vector<8x64xf32>
    %cst_7 = arith.constant 0.000000e+00 : f32
    %9 = vector.broadcast %cst_7 : f32 to vector<8x64xf32>
    %10 = arith.maximumf %8, %9 : vector<8x64xf32>
    %c0_8 = arith.constant 0 : index
    %c0_9 = arith.constant 0 : index
    %11 = vector.load %arg4[%c0_8, %c0_9] : memref<64x32xf32, #tpu.memory_space<vmem>>, vector<64x32xf32>
    %cst_10 = arith.constant dense<0.000000e+00> : vector<8x32xf32>
    %12 = tpu.matmul %10, %11, %cst_10 {dimension_numbers = #tpu.dot_dimension_numbers<[1], [0], [0], [1], [0, 0, 1, 1], [], []>} : vector<8x64xf32>, vector<64x32xf32>, vector<8x32xf32> -> vector<8x32xf32>
    %c0_11 = arith.constant 0 : index
    %c0_12 = arith.constant 0 : index
    %13 = vector.load %arg5[%c0_11, %c0_12] : memref<1x32xf32, #tpu.memory_space<vmem>>, vector<1x32xf32>
    %14 = vector.broadcast %13 : vector<1x32xf32> to vector<8x32xf32>
    %15 = arith.mulf %12, %14 : vector<8x32xf32>
    %c0_13 = arith.constant 0 : index
    %c0_14 = arith.constant 0 : index
    %16 = vector.load %arg6[%c0_13, %c0_14] : memref<1x32xf32, #tpu.memory_space<vmem>>, vector<1x32xf32>
    %17 = vector.broadcast %16 : vector<1x32xf32> to vector<8x32xf32>
    %18 = arith.addf %15, %17 : vector<8x32xf32>
    %cst_15 = arith.constant 0.000000e+00 : f32
    %19 = vector.broadcast %cst_15 : f32 to vector<8x32xf32>
    %20 = arith.maximumf %18, %19 : vector<8x32xf32>
    %c0_16 = arith.constant 0 : index
    %c0_17 = arith.constant 0 : index
    %21 = vector.load %arg7[%c0_16, %c0_17] : memref<32x8xf32, #tpu.memory_space<vmem>>, vector<32x8xf32>
    %cst_18 = arith.constant dense<0.000000e+00> : vector<8x8xf32>
    %22 = tpu.matmul %20, %21, %cst_18 {dimension_numbers = #tpu.dot_dimension_numbers<[1], [0], [0], [1], [0, 0, 1, 1], [], []>} : vector<8x32xf32>, vector<32x8xf32>, vector<8x8xf32> -> vector<8x8xf32>
    %c0_19 = arith.constant 0 : index
    %c0_20 = arith.constant 0 : index
    %23 = vector.load %arg8[%c0_19, %c0_20] : memref<1x8xf32, #tpu.memory_space<vmem>>, vector<1x8xf32>
    %24 = vector.broadcast %23 : vector<1x8xf32> to vector<8x8xf32>
    %25 = arith.addf %22, %24 : vector<8x8xf32>
    %26 = arith.negf %25 : vector<8x8xf32>
    %27 = math.exp %26 : vector<8x8xf32>
    %cst_21 = arith.constant 1.000000e+00 : f32
    %28 = vector.broadcast %cst_21 : f32 to vector<8x8xf32>
    %29 = arith.addf %28, %27 : vector<8x8xf32>
    %30 = arith.divf %28, %29 : vector<8x8xf32>
    %c0_22 = arith.constant 0 : index
    %c0_23 = arith.constant 0 : index
    %31 = vector.load %arg9[%c0_22, %c0_23] : memref<8x8xf32, #tpu.memory_space<vmem>>, vector<8x8xf32>
    tpu.vector_store %arg9[%c0_22, %c0_23], %30 {strides = array<i32>} : memref<8x8xf32, #tpu.memory_space<vmem>>, vector<8x8xf32>,
    return
  }
}

</mosaic_0001>

<llo_original>
// kernel: tpu_custom_call.1
$region0: #{tpu_custom_call.1}
  #allocation0 [shape = 'u32[]', space=smem, size = 0x4, offset = 0x4, fixed_abs, tag = 'smem constant byte address 0x4 - core index']
  #allocation1 [shape = 'u32[72,128]{1,0:T(1,128)}', space=vmem, size = 0x9000, scoped, tag = 'internal scratch']
  %s0 = inlined_call_operand.vmem [shape: f32[8,32], index: 0, kind: input, shape index: {}]
  %s1 = inlined_call_operand.vmem [shape: f32[32,64], index: 1, kind: input, shape index: {}]
  %s2 = inlined_call_operand.vmem [shape: f32[1,64], index: 2, kind: input, shape index: {}]
  %s3 = inlined_call_operand.vmem [shape: f32[1,64], index: 3, kind: input, shape index: {}]
  %s4 = inlined_call_operand.vmem [shape: f32[64,32], index: 4, kind: input, shape index: {}]
  %s5 = inlined_call_operand.vmem [shape: f32[1,32], index: 5, kind: input, shape index: {}]
  %s6 = inlined_call_operand.vmem [shape: f32[1,32], index: 6, kind: input, shape index: {}]
  %s7 = inlined_call_operand.vmem [shape: f32[32,8], index: 7, kind: input, shape index: {}]
  %s8 = inlined_call_operand.vmem [shape: f32[1,8], index: 8, kind: input, shape index: {}]
  %s9 = inlined_call_operand.hbm [shape: f32[8,8], index: 9, kind: output, shape index: {}]
  %s10 = sld [smem:[#allocation0]]
  $region46: #{tpu_custom_call.1} parent=0
    _
  %s12 = ssub.s32 1, %s10
  %s13 = scalar_select 0, %s12, %s10
  $region1: #{tpu_custom_call.1} parent=0
    #allocation2 [shape = 'u8[4096]{0}', space=vmem, size = 0x1000, scoped, tag = 'output window, operand 0, single buffered']
    #allocation3 [shape = 's32[1]{0}', space=sflag, size = 0x4, scoped, tag = 'scoped memory for tpu_custom_call.1']
    %14 = vsyncpa [#allocation3], 0
    // Predicated region
    $region2: #{tpu_custom_call.1} parent=1 // pred_check
      _
    $region3: #{tpu_custom_call.1} parent=1 // pred_check_branch
      %16 = sbr.rel (0) target = $region5
    $region4: #{tpu_custom_call.1} parent=1 // pred_region
      _
    $region5: #{tpu_custom_call.1} parent=1 // pred_fallthru
      _
    // Predicated region
    $region6: #{tpu_custom_call.1} parent=1 // pred_check
      _
    $region7: #{tpu_custom_call.1} parent=1 // pred_check_branch
      %18 = sbr.rel (0) target = $region9
    $region8: #{tpu_custom_call.1} parent=1 // pred_region
      _
    $region9: #{tpu_custom_call.1} parent=1 // pred_fallthru
      _
    // Predicated region
    $region10: #{tpu_custom_call.1} parent=1 // pred_check
      _
    $region11: #{tpu_custom_call.1} parent=1 // pred_check_branch
      %20 = sbr.rel (0) target = $region13
    $region12: #{tpu_custom_call.1} parent=1 // pred_region
      _
    $region13: #{tpu_custom_call.1} parent=1 // pred_fallthru
      _
    // Predicated region
    $region14: #{tpu_custom_call.1} parent=1 // pred_check
      _
    $region15: #{tpu_custom_call.1} parent=1 // pred_check_branch
      %22 = sbr.rel (0) target = $region17
    $region16: #{tpu_custom_call.1} parent=1 // pred_region
      _
    $region17: #{tpu_custom_call.1} parent=1 // pred_fallthru
      _
    // Predicated region
    $region18: #{tpu_custom_call.1} parent=1 // pred_check
      _
    $region19: #{tpu_custom_call.1} parent=1 // pred_check_branch
      %24 = sbr.rel (0) target = $region21
    $region20: #{tpu_custom_call.1} parent=1 // pred_region
      _
    $region21: #{tpu_custom_call.1} parent=1 // pred_fallthru
      _
    // Predicated region
    $region22: #{tpu_custom_call.1} parent=1 // pred_check
      _
    $region23: #{tpu_custom_call.1} parent=1 // pred_check_branch
      %26 = sbr.rel (0) target = $region25
    $region24: #{tpu_custom_call.1} parent=1 // pred_region
      _
    $region25: #{tpu_custom_call.1} parent=1 // pred_fallthru
      _
    // Predicated region
    $region26: #{tpu_custom_call.1} parent=1 // pred_check
      _
    $region27: #{tpu_custom_call.1} parent=1 // pred_check_branch
      %28 = sbr.rel (0) target = $region29
    $region28: #{tpu_custom_call.1} parent=1 // pred_region
      _
    $region29: #{tpu_custom_call.1} parent=1 // pred_fallthru
      _
    // Predicated region
    $region30: #{tpu_custom_call.1} parent=1 // pred_check
      _
    $region31: #{tpu_custom_call.1} parent=1 // pred_check_branch
      %30 = sbr.rel (0) target = $region33
    $region32: #{tpu_custom_call.1} parent=1 // pred_region
      _
    $region33: #{tpu_custom_call.1} parent=1 // pred_fallthru
      _
    // Predicated region
    $region34: #{tpu_custom_call.1} parent=1 // pred_check
      _
    $region35: #{tpu_custom_call.1} parent=1 // pred_check_branch
      %32 = sbr.rel (0) target = $region37
    $region36: #{tpu_custom_call.1} parent=1 // pred_region
      _
    $region37: #{tpu_custom_call.1} parent=1 // pred_fallthru
      _
    %v33 = vld [vmem:[%s0] sm:$0xff]
    %v34 = vld [vmem:[%s1] sm:$0xff]
    %v35 = vld [vmem:[%s1 + $0x8] sm:$0xff]
    %v36 = vld [vmem:[%s1 + $0x10] sm:$0xff]
    %v37 = vld [vmem:[%s1 + $0x18] sm:$0xff]
    %vm38 = vcmask 261120
    %v40 = vsel %vm38, %v33, 0
    %42 = vmatpush.msra.mxu0 0.0
    %43 = vmatpush.msra.mxu0 0.0
    %44 = vmatpush.msra.mxu0 0.0
    %45 = vmatpush.msra.mxu0 0.0
    %46 = vmatpush.msra.mxu0 0.0
    %47 = vmatpush.msra.mxu0 0.0
    %48 = vmatpush.msra.mxu0 0.0
    %49 = vmatpush.msra.mxu0 0.0
    %50 = vmatpush.msra.mxu0 0.0
    %51 = vmatpush.msra.mxu0 0.0
    %52 = vmatpush.msra.mxu0 0.0
    %53 = vmatpush.msra.mxu0 0.0
    %54 = vmatpush.msra.mxu0 %v37
    %55 = vmatpush.msra.mxu0 %v36
    %56 = vmatpush.msra.mxu0 %v35
    %57 = vmatpush.msra.mxu0 %v34
    %58 = vmatmul.f32.gmra.mxu0 %v40
    %v59 = vpop.f32.mrf.mxu0
    %v60 = vadd.f32 0.0, %v59
    %61 = vdwg.mxu0
    %v62 = vld [vmem:[%s2] sm:$0x1]
    %v64 = vperm.slane %v62, 0
    %v66 = vmul.f32 %v60, %v64
    %v67 = vld [vmem:[%s3] sm:$0x1]
    %v69 = vperm.slane %v67, 0
    %v71 = vadd.f32 %v66, %v69
    %v72 = vmax.f32 %v71, 0.0
    %v73 = vld [vmem:[%s4] sm:$0xff]
    %v74 = vld [vmem:[%s4 + $0x8] sm:$0xff]
    %v75 = vld [vmem:[%s4 + $0x10] sm:$0xff]
    %v76 = vld [vmem:[%s4 + $0x18] sm:$0xff]
    %v77 = vld [vmem:[%s4 + $0x20] sm:$0xff]
    %v78 = vld [vmem:[%s4 + $0x28] sm:$0xff]
    %v79 = vld [vmem:[%s4 + $0x30] sm:$0xff]
    %v80 = vld [vmem:[%s4 + $0x38] sm:$0xff]
    %vm81 = vcmask 523264
    %v83 = vsel %vm81, %v72, 0
    %85 = vmatpush.msra.mxu0 0.0
    %86 = vmatpush.msra.mxu0 0.0
    %87 = vmatpush.msra.mxu0 0.0
    %88 = vmatpush.msra.mxu0 0.0
    %89 = vmatpush.msra.mxu0 0.0
    %90 = vmatpush.msra.mxu0 0.0
    %91 = vmatpush.msra.mxu0 0.0
    %92 = vmatpush.msra.mxu0 0.0
    %93 = vmatpush.msra.mxu0 %v80
    %94 = vmatpush.msra.mxu0 %v79
    %95 = vmatpush.msra.mxu0 %v78
    %96 = vmatpush.msra.mxu0 %v77
    %97 = vmatpush.msra.mxu0 %v76
    %98 = vmatpush.msra.mxu0 %v75
    %99 = vmatpush.msra.mxu0 %v74
    %100 = vmatpush.msra.mxu0 %v73
    %101 = vmatmul.f32.gmra.mxu0 %v83
    %v102 = vpop.f32.mrf.mxu0
    %v103 = vadd.f32 0.0, %v102
    %104 = vdwg.mxu0
    %v105 = vld [vmem:[%s5] sm:$0x1]
    %v107 = vperm.slane %v105, 0
    %v109 = vmul.f32 %v103, %v107
    %v110 = vld [vmem:[%s6] sm:$0x1]
    %v112 = vperm.slane %v110, 0
    %v114 = vadd.f32 %v109, %v112
    %v115 = vmax.f32 %v114, 0.0
    %v116 = vld [vmem:[%s7] sm:$0xff]
    %v117 = vld [vmem:[%s7 + $0x8] sm:$0xff]
    %v118 = vld [vmem:[%s7 + $0x10] sm:$0xff]
    %v119 = vld [vmem:[%s7 + $0x18] sm:$0xff]
    %v120 = vld [vmem:[%s8] sm:$0x1]
    %v122 = vperm.slane %v120, 0
    %v125 = vsel %vm38, %v115, 0
    %127 = vmatpush.msra.mxu0 0.0
    %128 = vmatpush.msra.mxu0 0.0
    %129 = vmatpush.msra.mxu0 0.0
    %130 = vmatpush.msra.mxu0 0.0
    %131 = vmatpush.msra.mxu0 0.0
    %132 = vmatpush.msra.mxu0 0.0
    %133 = vmatpush.msra.mxu0 0.0
    %134 = vmatpush.msra.mxu0 0.0
    %135 = vmatpush.msra.mxu0 0.0
    %136 = vmatpush.msra.mxu0 0.0
    %137 = vmatpush.msra.mxu0 0.0
    %138 = vmatpush.msra.mxu0 0.0
    %139 = vmatpush.msra.mxu0 %v119
    %140 = vmatpush.msra.mxu0 %v118
    %141 = vmatpush.msra.mxu0 %v117
    %142 = vmatpush.msra.mxu0 %v116
    %143 = vmatmul.f32.gmra.mxu0 %v125
    %v144 = vpop.f32.mrf.mxu0
    %v145 = vadd.f32 %v122, %v144
    %146 = vdwg.mxu0
    %v147 = vxor.u32 %v145, 2147483648
    %v148 = vmul.f32 %v147, 1.442695
    %v149 = vpow.pop %v148
    %v150 = vadd.f32 %v149, 1.0
    %v151 = vrcp.pop %v150
    %v152 = vmul.f32 %v150, %v151
    %v153 = vsub.f32 1.0, %v152
    %v154 = vmul.f32 %v151, %v153
    %v155 = vadd.f32 %v151, %v154
    %vm156 = vweird.f32 %v150
    %vm157 = vweird.f32 %v151
    %vm158 = vmor %vm156, %vm157
    %v159 = vsel %vm158, %v151, %v155
    %v160 = vand.u32 2147483647, %v150
    %vm161 = vcmp.eq.f32.partialorder %v160, 8.507059e+37
    %v162 = vand.u32 %v150, 2147483648
    %v163 = vor.u32 1.1754944e-38, %v162
    %v164 = vsel %vm161, %v163, %v159
    %v165 = vmul.f32 1.0, %v164
    %vm166 = vcmask 64512
    %167 = vst.msk [vmem:[#allocation2] sm:$0xff] %vm166, %v165
    // Predicated region
    $region38: #{tpu_custom_call.1} parent=1 // pred_check
      _
    $region39: #{tpu_custom_call.1} parent=1 // pred_check_branch
      %169 = sbr.rel (0) target = $region41
    $region40: #{tpu_custom_call.1} parent=1 // pred_region
      %171 = vsyncadd [#allocation3], 0
      %s173 = sshll.u32 [#allocation2], 4
      %s174 = int_to_ptr.vmem [resolvable:$true] %s173
      %s175 = sshll.u32 %s9, 4
      %s176 = int_to_ptr.hbm [resolvable:$true] %s175
      %178 = dma.vmem_to_hbm [thread:$0]  %s174, 128, %s176, [#allocation3]
    $region41: #{tpu_custom_call.1} parent=1 // pred_fallthru
      _
    // Predicated region
    $region42: #{tpu_custom_call.1} parent=1 // pred_check
      _
    $region43: #{tpu_custom_call.1} parent=1 // pred_check_branch
      %180 = sbr.rel (0) target = $region45
    $region44: #{tpu_custom_call.1} parent=1 // pred_region
      %182 = dma.done [#allocation3], 128
    $region45: #{tpu_custom_call.1} parent=1 // pred_fallthru
      _
    %183 = vsyncpa [#allocation3], 1

</llo_original>
